<compile_context>
chip_gen: v5e
topology: v5e:2x2
jax: 0.10.0
libtpu: 0.0.40
codegen_flags: <defaults>
</compile_context>

<pallas_src>
import jax
import jax.numpy as jnp
from jax.experimental import pallas as pl
from jax.experimental.pallas import tpu as pltpu

BN_EPS = 1e-5
LEAKY_SLOPE = 0.01


def ffblock_kernel(x_ref, w_ref, gamma_ref, beta_ref, o_ref):
    # x: (N, in_feat)  w: (TILE_F, in_feat)  gamma/beta: (1, TILE_F)
    x = x_ref[...]
    w = w_ref[...]

    # Linear: contract in_feat (dim 1 of both) -> (N, TILE_F); MXU, f32 accum.
    # Bias intentionally omitted: exactly cancelled by BN mean subtraction.
    y = jax.lax.dot_general(
        x, w,
        dimension_numbers=(((1,), (1,)), ((), ())),
        preferred_element_type=jnp.float32,
    )

    # BatchNorm1d (training mode): batch mean / biased batch variance over N.
    mean = jnp.mean(y, axis=0, keepdims=True)          # (1, TILE_F)
    yc = y - mean                                      # centered, reused
    var = jnp.mean(yc * yc, axis=0, keepdims=True)     # biased variance
    z = gamma_ref[...] * (yc * jax.lax.rsqrt(var + BN_EPS)) + beta_ref[...]

    # LeakyReLU(0.01): identical to where(z>=0, z, s*z) for 0 < s < 1.
    o_ref[...] = jnp.maximum(z, LEAKY_SLOPE * z).astype(o_ref.dtype)


def ffblock_forward(x, w, b, gamma, beta, tile_f=None):
    """x: (N, in_feat), w: (out_feat, in_feat), b/gamma/beta: (out_feat,).

    `b` is accepted for API parity with nn.Linear but never used: in
    training-mode BN the bias is mathematically cancelled by the batch mean.
    """
    del b  # cancelled exactly by BatchNorm's batch-mean subtraction
    n, in_feat = x.shape
    out_feat = w.shape[0]

    # Lane-dense feature tiles (multiples of 128) when possible; otherwise a
    # single full-extent block (always legal).
    if tile_f is None:
        if out_feat % 256 == 0:
            tile_f = 256
        elif out_feat % 128 == 0:
            tile_f = 128
        else:
            tile_f = out_feat
    assert out_feat % tile_f == 0
    n_tiles = out_feat // tile_f

    g2 = gamma.reshape(1, out_feat)
    be2 = beta.reshape(1, out_feat)

    grid_spec = pltpu.PrefetchScalarGridSpec(
        num_scalar_prefetch=0,
        grid=(n_tiles,),
        in_specs=[
            # x: full block, reused by every feature tile.
            pl.BlockSpec((n, in_feat), lambda f: (0, 0)),
            # w: one feature tile of the (out_feat, in_feat) weight.
            pl.BlockSpec((tile_f, in_feat), lambda f: (f, 0)),
            pl.BlockSpec((1, tile_f), lambda f: (0, f)),   # gamma
            pl.BlockSpec((1, tile_f), lambda f: (0, f)),   # beta
        ],
        out_specs=pl.BlockSpec((n, tile_f), lambda f: (0, f)),
    )

    return pl.pallas_call(
        ffblock_kernel,
        out_shape=jax.ShapeDtypeStruct((n, out_feat), jnp.float32),
        grid_spec=grid_spec,
        compiler_params=pltpu.CompilerParams(
            # Feature tiles are independent -> shard across v7x's 2 TCs.
            dimension_semantics=("parallel",),
            # Safe scoped budget across v5e / v6e / v7x; tiles are tiny anyway.
            vmem_limit_bytes=32 * 1024 * 1024,
        ),
    )(x, w, g2, be2)


def ffblock_reference(x, w, b, gamma, beta):
    # Faithful to the PyTorch module (bias included) to verify the kernel's
    # bias-drop is exact up to float rounding.
    y = x @ w.T + b[None, :]
    mean = jnp.mean(y, axis=0, keepdims=True)
    var = jnp.mean((y - mean) ** 2, axis=0, keepdims=True)
    y_hat = (y - mean) / jnp.sqrt(var + BN_EPS)
    z = gamma[None, :] * y_hat + beta[None, :]
    return jnp.where(z >= 0, z, LEAKY_SLOPE * z)


if __name__ == "__main__":
    # Small but lane-aligned shapes: batch=64, in_feat=128, out_feat=256
    # (out_feat tiled as 2 x 128 -> grid=(2,), exercising the pipeline).
    N, IN_FEAT, OUT_FEAT = 64, 128, 256

    key = jax.random.PRNGKey(0)
    kx, kw, kb, kg, kbeta = jax.random.split(key, 5)

    x = jax.random.normal(kx, (N, IN_FEAT), dtype=jnp.float32)

    # PyTorch-style uniform init for Linear.
    bound = 1.0 / jnp.sqrt(jnp.float32(IN_FEAT))
    w = jax.random.uniform(kw, (OUT_FEAT, IN_FEAT), jnp.float32, -bound, bound)
    b = jax.random.uniform(kb, (OUT_FEAT,), jnp.float32, -bound, bound)
    # Non-trivial BN affine params (PyTorch default would be gamma=1, beta=0).
    gamma = 1.0 + 0.1 * jax.random.normal(kg, (OUT_FEAT,), dtype=jnp.float32)
    beta = 0.1 * jax.random.normal(kbeta, (OUT_FEAT,), dtype=jnp.float32)

    out = ffblock_forward(x, w, b, gamma, beta, tile_f=128)
    out = jax.block_until_ready(out)

    ref = ffblock_reference(x, w, b, gamma, beta)
    assert out.shape == (N, OUT_FEAT)
    assert jnp.allclose(out, ref, atol=1e-4, rtol=1e-4), "mismatch vs reference"

    print("KERNEL_OK")
</pallas_src>

<mosaic_0001>
module attributes {stable_mosaic.version = 11 : i64} {
  func.func @ffblock_kernel(%arg0: i32, %arg1: memref<64x128xf32, #tpu.memory_space<vmem>>, %arg2: memref<128x128xf32, #tpu.memory_space<vmem>>, %arg3: memref<1x128xf32, #tpu.memory_space<vmem>>, %arg4: memref<1x128xf32, #tpu.memory_space<vmem>>, %arg5: memref<64x128xf32, #tpu.memory_space<vmem>>) attributes {dimension_semantics = [#tpu.dimension_semantics<parallel>], iteration_bounds = array<i64: 2>, scalar_prefetch = 0 : i64, scratch_operands = 0 : i64, tpu.core_type = #tpu.core_type<tc>, window_params = [{pipeline_mode = #tpu.pipeline_mode<synchronous>, transform_indices = @transform_0, window_bounds = array<i64: 64, 128>}, {transform_indices = @transform_1, window_bounds = array<i64: 128, 128>}, {transform_indices = @transform_2, window_bounds = array<i64: 1, 128>}, {transform_indices = @transform_3, window_bounds = array<i64: 1, 128>}, {transform_indices = @transform_4, window_bounds = array<i64: 64, 128>}]} {
    %c0 = arith.constant 0 : index
    %c0_0 = arith.constant 0 : index
    %0 = vector.load %arg1[%c0, %c0_0] : memref<64x128xf32, #tpu.memory_space<vmem>>, vector<64x128xf32>
    %c0_1 = arith.constant 0 : index
    %c0_2 = arith.constant 0 : index
    %1 = vector.load %arg2[%c0_1, %c0_2] : memref<128x128xf32, #tpu.memory_space<vmem>>, vector<128x128xf32>
    %cst = arith.constant dense<0.000000e+00> : vector<64x128xf32>
    %2 = tpu.matmul %0, %1, %cst {dimension_numbers = #tpu.dot_dimension_numbers<[1], [1], [0], [0], [0, 0, 1, 0], [], []>} : vector<64x128xf32>, vector<128x128xf32>, vector<64x128xf32> -> vector<64x128xf32>
    %cst_3 = arith.constant dense<0.000000e+00> : vector<128xf32>
    %3 = vector.multi_reduction <add>, %2, %cst_3 [0] : vector<64x128xf32> to vector<128xf32>
    %4 = vector.shape_cast %3 : vector<128xf32> to vector<1x128xf32>
    %cst_4 = arith.constant 6.400000e+01 : f32
    %5 = vector.broadcast %cst_4 : f32 to vector<1x128xf32>
    %6 = arith.divf %4, %5 : vector<1x128xf32>
    %7 = vector.broadcast %6 : vector<1x128xf32> to vector<64x128xf32>
    %8 = arith.subf %2, %7 : vector<64x128xf32>
    %9 = arith.mulf %8, %8 : vector<64x128xf32>
    %cst_5 = arith.constant dense<0.000000e+00> : vector<128xf32>
    %10 = vector.multi_reduction <add>, %9, %cst_5 [0] : vector<64x128xf32> to vector<128xf32>
    %11 = vector.shape_cast %10 : vector<128xf32> to vector<1x128xf32>
    %cst_6 = arith.constant 6.400000e+01 : f32
    %12 = vector.broadcast %cst_6 : f32 to vector<1x128xf32>
    %13 = arith.divf %11, %12 : vector<1x128xf32>
    %c0_7 = arith.constant 0 : index
    %c0_8 = arith.constant 0 : index
    %14 = vector.load %arg3[%c0_7, %c0_8] : memref<1x128xf32, #tpu.memory_space<vmem>>, vector<1x128xf32>
    %cst_9 = arith.constant 9.99999974E-6 : f32
    %15 = vector.broadcast %cst_9 : f32 to vector<1x128xf32>
    %16 = arith.addf %13, %15 : vector<1x128xf32>
    %17 = math.rsqrt %16 : vector<1x128xf32>
    %18 = vector.broadcast %17 : vector<1x128xf32> to vector<64x128xf32>
    %19 = arith.mulf %8, %18 : vector<64x128xf32>
    %20 = vector.broadcast %14 : vector<1x128xf32> to vector<64x128xf32>
    %21 = arith.mulf %20, %19 : vector<64x128xf32>
    %c0_10 = arith.constant 0 : index
    %c0_11 = arith.constant 0 : index
    %22 = vector.load %arg4[%c0_10, %c0_11] : memref<1x128xf32, #tpu.memory_space<vmem>>, vector<1x128xf32>
    %23 = vector.broadcast %22 : vector<1x128xf32> to vector<64x128xf32>
    %24 = arith.addf %21, %23 : vector<64x128xf32>
    %cst_12 = arith.constant 0.00999999977 : f32
    %25 = vector.broadcast %cst_12 : f32 to vector<64x128xf32>
    %26 = arith.mulf %25, %24 : vector<64x128xf32>
    %27 = arith.maximumf %24, %26 : vector<64x128xf32>
    %c0_13 = arith.constant 0 : index
    %c0_14 = arith.constant 0 : index
    %28 = vector.load %arg5[%c0_13, %c0_14] : memref<64x128xf32, #tpu.memory_space<vmem>>, vector<64x128xf32>
    tpu.vector_store %arg5[%c0_13, %c0_14], %27 {strides = array<i32>} : memref<64x128xf32, #tpu.memory_space<vmem>>, vector<64x128xf32>,
    return
  }
  func.func @transform_0(%arg0: i32) -> (i32, i32) {
    %c0_i32 = arith.constant 0 : i32
    %c0_i32_0 = arith.constant 0 : i32
    %c0_i32_1 = arith.constant 0 : i32
    return %c0_i32, %c0_i32_0 : i32, i32
  }
  func.func @transform_1(%arg0: i32) -> (i32, i32) {
    %c0_i32 = arith.constant 0 : i32
    %c0_i32_0 = arith.constant 0 : i32
    return %arg0, %c0_i32 : i32, i32
  }
  func.func @transform_2(%arg0: i32) -> (i32, i32) {
    %c0_i32 = arith.constant 0 : i32
    %c0_i32_0 = arith.constant 0 : i32
    return %c0_i32, %arg0 : i32, i32
  }
  func.func @transform_3(%arg0: i32) -> (i32, i32) {
    %c0_i32 = arith.constant 0 : i32
    %c0_i32_0 = arith.constant 0 : i32
    return %c0_i32, %arg0 : i32, i32
  }
  func.func @transform_4(%arg0: i32) -> (i32, i32) {
    %c0_i32 = arith.constant 0 : i32
    %c0_i32_0 = arith.constant 0 : i32
    return %c0_i32, %arg0 : i32, i32
  }
}

</mosaic_0001>

<llo_original>
// kernel: tpu_custom_call.1
$region0: #{tpu_custom_call.1}
  #allocation0 [shape = 'u32[]', space=smem, size = 0x4, offset = 0x4, fixed_abs, tag = 'smem constant byte address 0x4 - core index']
  #allocation1 [shape = 'u32[72,128]{1,0:T(1,128)}', space=vmem, size = 0x9000, scoped, tag = 'internal scratch']
  %s0 = inlined_call_operand.hbm [shape: f32[64,128], index: 0, kind: input, shape index: {}]
  %s1 = inlined_call_operand.hbm [shape: f32[256,128], index: 1, kind: input, shape index: {}]
  %s2 = inlined_call_operand.hbm [shape: f32[1,256], index: 2, kind: input, shape index: {}]
  %s3 = inlined_call_operand.vmem [shape: f32[1,256], index: 3, kind: input, shape index: {}]
  %s4 = inlined_call_operand.hbm [shape: f32[64,256], index: 4, kind: output, shape index: {}]
  %s5 = sld [smem:[#allocation0]]
  $region61: #{tpu_custom_call.1} parent=0
    _
  %s7 = ssub.s32 1, %s5
  %s8 = scalar_select 0, %s7, %s5
  $region1: #{tpu_custom_call.1} parent=0
    #allocation2 [shape = 'u8[32768]{0}', space=vmem, size = 0x8000, scoped, tag = 'input window, operand 0, single buffered']
    #allocation3 [shape = 's32[2]{0}', space=sflag, size = 0x8, scoped, tag = 'scoped memory for tpu_custom_call.1']
    #allocation4 [shape = 's32[2]{0}', space=sflag, size = 0x8, scoped, tag = 'scoped memory for tpu_custom_call.1']
    #allocation5 [shape = 'u8[131072]{0}', space=vmem, size = 0x20000, scoped, tag = 'input window, operand 1']
    #allocation6 [shape = 's32[2]{0}', space=sflag, size = 0x8, scoped, tag = 'scoped memory for tpu_custom_call.1']
    #allocation7 [shape = 'u8[1024]{0}', space=vmem, size = 0x400, scoped, tag = 'input window, operand 2']
    #allocation8 [shape = 'u8[65536]{0}', space=vmem, size = 0x10000, scoped, tag = 'output window, operand 0']
    %9 = vsyncpa [#allocation3], 0
    %10 = vsyncpa [#allocation6], 0
    %s11 = scalar_lea.sflag [#allocation6], 1
    %12 = vsyncpa %s11, 0
    %13 = vsyncpa [#allocation4], 0
    %s14 = scalar_lea.sflag [#allocation4], 1
    %15 = vsyncpa %s14, 0
    loop: start=0, step=1, limit=4
    $region2: #{tpu_custom_call.1} parent=1 // loop_pre_header
      _
    $region3: #{tpu_custom_call.1} parent=1 // loop_header
      %s17 = sphi 0, %s21
      %p18 = scmp.ge.s32.totalorder %s17, 4
      %s25 = sphi 0, %s25
      %s27 = sphi 0, %s25
      %s28 = sphi 0, %s27
      %s42 = sphi 0, %s28
      %s48 = sphi 0, %s50
      %s51 = sphi 0, %s48
      %s52 = sphi 0, %s51
      %s68 = sphi 0, %s52
      %s74 = sphi 0, %s76
      %s77 = sphi 0, %s74
      %s78 = sphi 0, %s77
      %s94 = sphi 0, %s78
      %s100 = sphi 0, %s102
      %s103 = sphi 0, %s100
      %s104 = sphi 0, %s103
      %s120 = sphi 0, %s104
      %s126 = sphi 0, %s128
      %s129 = sphi 0, %s126
      %s130 = sphi 0, %s129
      %s146 = sphi 0, %s130
    $region4: #{tpu_custom_call.1} parent=1 // loop_header_branch
      %20 = sbr.rel (%p18) target = $region8
    $region5: #{tpu_custom_call.1} parent=1 // loop_body
      %s22 = ssub.s32 %s17, 1
      %s23 = ssub.s32 %s17, 2
      %s24 = sadd.s32 %s17, 1
      %s26 = sadd.s32 %s25, 1
      %p29 = scmp.eq.s32.totalorder %s17, 1
      %p30 = scmp.ne.s32.totalorder %s25, %s27
      %p31 = scmp.eq.s32.totalorder %s17, 0
      %p32 = por %p30, %p31
      %p33 = scmp.ne.s32.totalorder %s25, %s27
      %p34 = scmp.eq.s32.totalorder %s22, 1
      %p35 = por %p33, %p34
      %p36 = scmp.ne.s32.totalorder %s27, %s28
      %p37 = scmp.eq.s32.totalorder %s22, 0
      %p38 = por %p36, %p37
      %p39 = scmp.ne.s32.totalorder %s27, %s28
      %p40 = scmp.eq.s32.totalorder %s23, 1
      %p41 = por %p39, %p40
      %p43 = scmp.ne.s32.totalorder %s28, %s42
      %p44 = scmp.eq.s32.totalorder %s23, 0
      %p45 = por %p43, %p44
      %s46 = ssub.s32 %s17, %s24
      %p47 = scmp.eq.s32.totalorder %s46, 0
      %s49 = sadd.s32 %s48, 1
      %s50 = scalar_select %p47, %s48, %s49
      %p53 = pneg %p47
      %p54 = scmp.eq.s32.totalorder %s17, 1
      %p55 = por %p53, %p54
      %p56 = scmp.ne.s32.totalorder %s48, %s51
      %p57 = scmp.eq.s32.totalorder %s17, 0
      %p58 = por %p56, %p57
      %p59 = scmp.ne.s32.totalorder %s48, %s51
      %p60 = scmp.eq.s32.totalorder %s22, 1
      %p61 = por %p59, %p60
      %p62 = scmp.ne.s32.totalorder %s51, %s52
      %p63 = scmp.eq.s32.totalorder %s22, 0
      %p64 = por %p62, %p63
      %p65 = scmp.ne.s32.totalorder %s51, %s52
      %p66 = scmp.eq.s32.totalorder %s23, 1
      %p67 = por %p65, %p66
      %p69 = scmp.ne.s32.totalorder %s52, %s68
      %p70 = scmp.eq.s32.totalorder %s23, 0
      %p71 = por %p69, %p70
      %s72 = ssub.s32 %s17, %s24
      %p73 = scmp.eq.s32.totalorder %s72, 0
      %s75 = sadd.s32 %s74, 1
      %s76 = scalar_select %p73, %s74, %s75
      %p79 = pneg %p73
      %p80 = scmp.eq.s32.totalorder %s17, 1
      %p81 = por %p79, %p80
      %p82 = scmp.ne.s32.totalorder %s74, %s77
      %p83 = scmp.eq.s32.totalorder %s17, 0
      %p84 = por %p82, %p83
      %p85 = scmp.ne.s32.totalorder %s74, %s77
      %p86 = scmp.eq.s32.totalorder %s22, 1
      %p87 = por %p85, %p86
      %p88 = scmp.ne.s32.totalorder %s77, %s78
      %p89 = scmp.eq.s32.totalorder %s22, 0
      %p90 = por %p88, %p89
      %p91 = scmp.ne.s32.totalorder %s77, %s78
      %p92 = scmp.eq.s32.totalorder %s23, 1
      %p93 = por %p91, %p92
      %p95 = scmp.ne.s32.totalorder %s78, %s94
      %p96 = scmp.eq.s32.totalorder %s23, 0
      %p97 = por %p95, %p96
      %s98 = ssub.s32 %s17, %s24
      %p99 = scmp.eq.s32.totalorder %s98, 0
      %s101 = sadd.s32 %s100, 1
      %s102 = scalar_select %p99, %s100, %s101
      %p105 = pneg %p99
      %p106 = scmp.eq.s32.totalorder %s17, 1
      %p107 = por %p105, %p106
      %p108 = scmp.ne.s32.totalorder %s100, %s103
      %p109 = scmp.eq.s32.totalorder %s17, 0
      %p110 = por %p108, %p109
      %p111 = scmp.ne.s32.totalorder %s100, %s103
      %p112 = scmp.eq.s32.totalorder %s22, 1
      %p113 = por %p111, %p112
      %p114 = scmp.ne.s32.totalorder %s103, %s104
      %p115 = scmp.eq.s32.totalorder %s22, 0
      %p116 = por %p114, %p115
      %p117 = scmp.ne.s32.totalorder %s103, %s104
      %p118 = scmp.eq.s32.totalorder %s23, 1
      %p119 = por %p117, %p118
      %p121 = scmp.ne.s32.totalorder %s104, %s120
      %p122 = scmp.eq.s32.totalorder %s23, 0
      %p123 = por %p121, %p122
      %s124 = ssub.s32 %s17, %s24
      %p125 = scmp.eq.s32.totalorder %s124, 0
      %s127 = sadd.s32 %s126, 1
      %s128 = scalar_select %p125, %s126, %s127
      %p131 = pneg %p125
      %p132 = scmp.eq.s32.totalorder %s17, 1
      %p133 = por %p131, %p132
      %p134 = scmp.ne.s32.totalorder %s126, %s129
      %p135 = scmp.eq.s32.totalorder %s17, 0
      %p136 = por %p134, %p135
      %p137 = scmp.ne.s32.totalorder %s126, %s129
      %p138 = scmp.eq.s32.totalorder %s22, 1
      %p139 = por %p137, %p138
      %p140 = scmp.ne.s32.totalorder %s129, %s130
      %p141 = scmp.eq.s32.totalorder %s22, 0
      %p142 = por %p140, %p141
      %p143 = scmp.ne.s32.totalorder %s129, %s130
      %p144 = scmp.eq.s32.totalorder %s23, 1
      %p145 = por %p143, %p144
      %p147 = scmp.ne.s32.totalorder %s130, %s146
      %p148 = scmp.eq.s32.totalorder %s23, 0
      %p149 = por %p147, %p148
      %p150 = scmp.le.s32.totalorder 1, %s17
      %p151 = scmp.lt.s32.totalorder %s17, 3
      %p152 = pnand %p150, %p151
      %p153 = pneg %p152
      // Predicated region
      $region9: #{tpu_custom_call.1} parent=5 // pred_check
        _
      $region10: #{tpu_custom_call.1} parent=5 // pred_check_branch
        %155 = sbr.rel (%p152) target = $region12
      $region11: #{tpu_custom_call.1} parent=5 // pred_region
        %s156 = ssub.s32 %s17, 1
        // Predicated region
        $region13: #{tpu_custom_call.1} parent=11 // pred_check
          %p157 = pneg %p38
        $region14: #{tpu_custom_call.1} parent=11 // pred_check_branch
          %159 = sbr.rel (%p157) target = $region16
        $region15: #{tpu_custom_call.1} parent=11 // pred_region
          %161 = vsyncadd [#allocation3], 0
          %s162 = sshll.u32 %s0, 4
          %s163 = int_to_ptr.hbm [resolvable:$true] %s162
          %s164 = sshll.u32 [#allocation2], 4
          %s165 = int_to_ptr.vmem [resolvable:$true] %s164
          %170 = dma.hbm_to_vmem [thread:$0]  %s163, 1024, %s165, [#allocation3], 128, 128, 8
        $region16: #{tpu_custom_call.1} parent=11 // pred_fallthru
          _
      $region12: #{tpu_custom_call.1} parent=5 // pred_fallthru
        _
      %p171 = scmp.lt.s32.totalorder %s17, 2
      // Predicated region
      $region17: #{tpu_custom_call.1} parent=5 // pred_check
        %p172 = pneg %p171
      $region18: #{tpu_custom_call.1} parent=5 // pred_check_branch
        %174 = sbr.rel (%p172) target = $region20
      $region19: #{tpu_custom_call.1} parent=5 // pred_region
        // Predicated region
        $region21: #{tpu_custom_call.1} parent=19 // pred_check
          %p175 = pneg %p58
        $region22: #{tpu_custom_call.1} parent=19 // pred_check_branch
          %177 = sbr.rel (%p175) target = $region24
        $region23: #{tpu_custom_call.1} parent=19 // pred_region
          %s178 = sand.u32 %s17, 1
          %s179 = scalar_lea.sflag [#allocation6], %s178
          %s180 = sand.u32 %s48, 1
          %s181 = smul.addr %s180, 128
          %s182 = scalar_lea.vmem [#allocation5], %s181
          %s183 = smul.u32 16, %s17
          %185 = vsyncadd %s179, 0
          %s186 = smul.addr %s183, 8
          %s187 = scalar_lea.hbm %s1, %s186
          %s188 = sshll.u32 %s187, 4
          %s189 = int_to_ptr.hbm [resolvable:$true] %s188
          %s190 = sshll.u32 %s182, 4
          %s191 = int_to_ptr.vmem [resolvable:$true] %s190
          %196 = dma.hbm_to_vmem [thread:$0]  %s189, 2048, %s191, %s179, 128, 128, 8
        $region24: #{tpu_custom_call.1} parent=19 // pred_fallthru
          _
        // Predicated region
        $region25: #{tpu_custom_call.1} parent=19 // pred_check
          %p197 = pneg %p84
        $region26: #{tpu_custom_call.1} parent=19 // pred_check_branch
          %199 = sbr.rel (%p197) target = $region28
        $region27: #{tpu_custom_call.1} parent=19 // pred_region
          %s200 = sand.u32 %s17, 1
          %s201 = scalar_lea.sflag [#allocation6], %s200
          %s202 = sand.u32 %s74, 1
          %s203 = scalar_lea.vmem [#allocation7], %s202
          %205 = vsyncadd %s201, 0
          %s206 = scalar_lea.hbm %s2, %s17
          %s208 = sshll.u32 %s206, 4
          %s209 = int_to_ptr.hbm [resolvable:$true] %s208
          %s210 = sshll.u32 %s203, 4
          %s211 = int_to_ptr.vmem [resolvable:$true] %s210
          %213 = dma.hbm_to_vmem [thread:$0]  %s209, 16, %s211, %s201
        $region28: #{tpu_custom_call.1} parent=19 // pred_fallthru
          _
        // Predicated region
        $region29: #{tpu_custom_call.1} parent=19 // pred_check
          %p214 = pneg %p110
        $region30: #{tpu_custom_call.1} parent=19 // pred_check_branch
          %216 = sbr.rel (%p214) target = $region32
        $region31: #{tpu_custom_call.1} parent=19 // pred_region
          %p217 = scmp.lt.s32.totalorder %s17, 1
          %s218 = scalar_select %p217, %s17, 1
          %s219 = scalar_lea.vmem %s3, %s218
        $region32: #{tpu_custom_call.1} parent=19 // pred_fallthru
          _
      $region20: #{tpu_custom_call.1} parent=5 // pred_fallthru
        _
      %p220 = scmp.le.s32.totalorder 1, %s17
      %p221 = scmp.lt.s32.totalorder %s17, 3
      %p222 = pnand %p220, %p221
      %p223 = pneg %p222
      // Predicated region
      $region33: #{tpu_custom_call.1} parent=5 // pred_check
        _
      $region34: #{tpu_custom_call.1} parent=5 // pred_check_branch
        %225 = sbr.rel (%p222) target = $region36
      $region35: #{tpu_custom_call.1} parent=5 // pred_region
        %s226 = ssub.s32 %s17, 1
        // Predicated region
        $region37: #{tpu_custom_call.1} parent=35 // pred_check
          %p227 = pneg %p38
        $region38: #{tpu_custom_call.1} parent=35 // pred_check_branch
          %229 = sbr.rel (%p227) target = $region40
        $region39: #{tpu_custom_call.1} parent=35 // pred_region
          %231 = dma.done [#allocation3], 1024
        $region40: #{tpu_custom_call.1} parent=35 // pred_fallthru
          _
        %s232 = sand.u32 %s22, 1
        %s233 = scalar_lea.sflag [#allocation6], %s232
        %s234 = sand.u32 %s51, 1
        %s235 = smul.addr %s234, 128
        %s236 = scalar_lea.vmem [#allocation5], %s235
        // Predicated region
        $region41: #{tpu_custom_call.1} parent=35 // pred_check
          %p237 = pneg %p64
        $region42: #{tpu_custom_call.1} parent=35 // pred_check_branch
          %239 = sbr.rel (%p237) target = $region44
        $region43: #{tpu_custom_call.1} parent=35 // pred_region
          %241 = dma.done %s233, 2048
        $region44: #{tpu_custom_call.1} parent=35 // pred_fallthru
          _
        %s242 = sand.u32 %s22, 1
        %s243 = scalar_lea.sflag [#allocation6], %s242
        %s244 = sand.u32 %s77, 1
        %s245 = scalar_lea.vmem [#allocation7], %s244
        // Predicated region
        $region45: #{tpu_custom_call.1} parent=35 // pred_check
          %p246 = pneg %p90
        $region46: #{tpu_custom_call.1} parent=35 // pred_check_branch
          %248 = sbr.rel (%p246) target = $region48
        $region47: #{tpu_custom_call.1} parent=35 // pred_region
          %250 = dma.done %s243, 16
        $region48: #{tpu_custom_call.1} parent=35 // pred_fallthru
          _
        %p251 = pneg %p38
        %p252 = pneg %p35
        %s253 = sand.u32 %s22, 1
        %s254 = scalar_lea.sflag [#allocation6], %s253
        %s255 = sand.u32 %s51, 1
        %s256 = smul.addr %s255, 128
        %s257 = scalar_lea.vmem [#allocation5], %s256
        %p258 = pneg %p64
        %p259 = pneg %p61
        %s260 = sand.u32 %s22, 1
        %s261 = scalar_lea.sflag [#allocation6], %s260
        %s262 = sand.u32 %s77, 1
        %s263 = scalar_lea.vmem [#allocation7], %s262
        %p264 = pneg %p90
        %p265 = pneg %p87
        %p266 = scmp.lt.s32.totalorder %s22, 1
        %s267 = scalar_select %p266, %s22, 1
        %s268 = scalar_lea.vmem %s3, %s267
        %p269 = pneg %p116
        %p270 = pneg %p113
        %p271 = pneg %p142
        %p272 = pneg %p139
        %s273 = sand.u32 %s129, 1
        %s274 = scalar_lea.sflag [#allocation4], %s273
        %s275 = sand.u32 %s129, 1
        %s276 = smul.addr %s275, 64
        %s277 = scalar_lea.vmem [#allocation8], %s276
        %s278 = smul.u32 16, %s22
        %p279 = scmp.lt.s32.totalorder %s22, 1
        %s280 = scalar_select %p279, %s22, 1
        %s281 = scalar_lea.vmem %s3, %s280
        %v282 = vld [vmem:[#allocation2] sm:$0xff]
        %v283 = vld [vmem:[#allocation2 + $0x8] sm:$0xff]
        %v284 = vld [vmem:[#allocation2 + $0x10] sm:$0xff]
        %v285 = vld [vmem:[#allocation2 + $0x18] sm:$0xff]
        %v286 = vld [vmem:[#allocation2 + $0x20] sm:$0xff]
        %v287 = vld [vmem:[#allocation2 + $0x28] sm:$0xff]
        %v288 = vld [vmem:[#allocation2 + $0x30] sm:$0xff]
        %v289 = vld [vmem:[#allocation2 + $0x38] sm:$0xff]
        %v290 = vld [vmem:[%s236] sm:$0xff]
        %v291 = vld [vmem:[%s236 + $0x8] sm:$0xff]
        %v292 = vld [vmem:[%s236 + $0x10] sm:$0xff]
        %v293 = vld [vmem:[%s236 + $0x18] sm:$0xff]
        %v294 = vld [vmem:[%s236 + $0x20] sm:$0xff]
        %v295 = vld [vmem:[%s236 + $0x28] sm:$0xff]
        %v296 = vld [vmem:[%s236 + $0x30] sm:$0xff]
        %v297 = vld [vmem:[%s236 + $0x38] sm:$0xff]
        %v298 = vld [vmem:[%s236 + $0x40] sm:$0xff]
        %v299 = vld [vmem:[%s236 + $0x48] sm:$0xff]
        %v300 = vld [vmem:[%s236 + $0x50] sm:$0xff]
        %v301 = vld [vmem:[%s236 + $0x58] sm:$0xff]
        %v302 = vld [vmem:[%s236 + $0x60] sm:$0xff]
        %v303 = vld [vmem:[%s236 + $0x68] sm:$0xff]
        %v304 = vld [vmem:[%s236 + $0x70] sm:$0xff]
        %v305 = vld [vmem:[%s236 + $0x78] sm:$0xff]
        %306 = vmatpush.xpose.msra.mxu0 %v305
        %307 = vmatpush.xpose.msra.mxu0 %v304
        %308 = vmatpush.xpose.msra.mxu0 %v303
        %309 = vmatpush.xpose.msra.mxu0 %v302
        %310 = vmatpush.xpose.msra.mxu0 %v301
        %311 = vmatpush.xpose.msra.mxu0 %v300
        %312 = vmatpush.xpose.msra.mxu0 %v299
        %313 = vmatpush.xpose.msra.mxu0 %v298
        %314 = vmatpush.xpose.msra.mxu0 %v297
        %315 = vmatpush.xpose.msra.mxu0 %v296
        %316 = vmatpush.xpose.msra.mxu0 %v295
        %317 = vmatpush.xpose.msra.mxu0 %v294
        %318 = vmatpush.xpose.msra.mxu0 %v293
        %319 = vmatpush.xpose.msra.mxu0 %v292
        %320 = vmatpush.xpose.msra.mxu0 %v291
        %321 = vmatpush.xpose.msra.mxu0 %v290
        %322 = vmatmul.f32.gmra.mxu0 %v282
        %v323 = vpop.f32.mrf.mxu0
        %v324 = vadd.f32 0.0, %v323
        %325 = vmatmul.f32.gmra.mxu0 %v283
        %v326 = vpop.f32.mrf.mxu0
        %v327 = vadd.f32 0.0, %v326
        %328 = vmatmul.f32.gmra.mxu0 %v284
        %v329 = vpop.f32.mrf.mxu0
        %v330 = vadd.f32 0.0, %v329
        %331 = vmatmul.f32.gmra.mxu0 %v285
        %v332 = vpop.f32.mrf.mxu0
        %v333 = vadd.f32 0.0, %v332
        %334 = vmatmul.f32.gmra.mxu0 %v286
        %v335 = vpop.f32.mrf.mxu0
        %v336 = vadd.f32 0.0, %v335
        %337 = vmatmul.f32.gmra.mxu0 %v287
        %v338 = vpop.f32.mrf.mxu0
        %v339 = vadd.f32 0.0, %v338
        %340 = vmatmul.f32.gmra.mxu0 %v288
        %v341 = vpop.f32.mrf.mxu0
        %v342 = vadd.f32 0.0, %v341
        %343 = vmatmul.f32.gmra.mxu0 %v289
        %v344 = vpop.f32.mrf.mxu0
        %v345 = vadd.f32 0.0, %v344
        %346 = vdwg.mxu0
        %v347 = vadd.f32 %v324, %v327
        %v348 = vadd.f32 %v347, %v330
        %v349 = vadd.f32 %v348, %v333
        %v350 = vadd.f32 %v349, %v336
        %v351 = vadd.f32 %v350, %v339
        %v352 = vadd.f32 %v351, %v342
        %v353 = vadd.f32 %v352, %v345
        %v354 = vrot.slane %v353, 4
        %v355 = vadd.f32 %v353, %v354
        %v356 = vrot.slane %v355, 2
        %v357 = vadd.f32 %v355, %v356
        %v358 = vrot.slane %v357, 1
        %v359 = vadd.f32 %v357, %v358
        %v360 = vrcp.pop 64.0
        %v361 = vmul.f32 64.0, %v360
        %v362 = vsub.f32 1.0, %v361
        %v363 = vmul.f32 %v360, %v362
        %v364 = vadd.f32 %v360, %v363
        %vm365 = vweird.f32 %v360
        %v366 = vsel %vm365, %v360, %v364
        %v367 = vmul.f32 %v359, %v366
        %v368 = vsub.f32 %v324, %v367
        %v369 = vsub.f32 %v327, %v367
        %v370 = vsub.f32 %v330, %v367
        %v371 = vsub.f32 %v333, %v367
        %v372 = vsub.f32 %v336, %v367
        %v373 = vsub.f32 %v339, %v367
        %v374 = vsub.f32 %v342, %v367
        %v375 = vsub.f32 %v345, %v367
        %v376 = vmul.f32 %v368, %v368
        %v377 = vmul.f32 %v369, %v369
        %v378 = vmul.f32 %v370, %v370
        %v379 = vmul.f32 %v371, %v371
        %v380 = vmul.f32 %v372, %v372
        %v381 = vmul.f32 %v373, %v373
        %v382 = vmul.f32 %v374, %v374
        %v383 = vmul.f32 %v375, %v375
        %v384 = vadd.f32 %v376, %v377
        %v385 = vadd.f32 %v384, %v378
        %v386 = vadd.f32 %v385, %v379
        %v387 = vadd.f32 %v386, %v380
        %v388 = vadd.f32 %v387, %v381
        %v389 = vadd.f32 %v388, %v382
        %v390 = vadd.f32 %v389, %v383
        %v391 = vrot.slane %v390, 4
        %v392 = vadd.f32 %v390, %v391
        %v393 = vrot.slane %v392, 2
        %v394 = vadd.f32 %v392, %v393
        %v395 = vrot.slane %v394, 1
        %v396 = vadd.f32 %v394, %v395
        %v397 = vmul.f32 %v396, %v366
        %v398 = vld [vmem:[%s245] sm:$0x1]
        %v399 = vadd.f32 %v397, 1e-05
        %v400 = vrsqrt.pop %v399
        %v401 = vmul.f32 %v400, %v399
        %v402 = vmul.f32 %v401, %v400
        %v403 = vmul.f32 0.5, %v402
        %v404 = vsub.f32 1.5, %v403
        %v405 = vmul.f32 %v400, %v404
        %vm406 = vweird.f32 %v399
        %vm407 = vweird.f32 %v400
        %vm408 = vmor %vm406, %vm407
        %v409 = vsel %vm408, %v400, %v405
        %v410 = vmul.f32 %v368, %v409
        %v411 = vmul.f32 %v369, %v409
        %v412 = vmul.f32 %v370, %v409
        %v413 = vmul.f32 %v371, %v409
        %v414 = vmul.f32 %v372, %v409
        %v415 = vmul.f32 %v373, %v409
        %v416 = vmul.f32 %v374, %v409
        %v417 = vmul.f32 %v375, %v409
        %v419 = vperm.slane %v398, 0
        %v421 = vmul.f32 %v419, %v410
        %v422 = vmul.f32 %v419, %v411
        %v423 = vmul.f32 %v419, %v412
        %v424 = vmul.f32 %v419, %v413
        %v425 = vmul.f32 %v419, %v414
        %v426 = vmul.f32 %v419, %v415
        %v427 = vmul.f32 %v419, %v416
        %v428 = vmul.f32 %v419, %v417
        %v429 = vld [vmem:[%s281] sm:$0x1]
        %v431 = vperm.slane %v429, 0
        %v433 = vadd.f32 %v421, %v431
        %v434 = vadd.f32 %v422, %v431
        %v435 = vadd.f32 %v423, %v431
        %v436 = vadd.f32 %v424, %v431
        %v437 = vadd.f32 %v425, %v431
        %v438 = vadd.f32 %v426, %v431
        %v439 = vadd.f32 %v427, %v431
        %v440 = vadd.f32 %v428, %v431
        %v441 = vmul.f32 %v433, 0.01
        %v442 = vmul.f32 %v434, 0.01
        %v443 = vmul.f32 %v435, 0.01
        %v444 = vmul.f32 %v436, 0.01
        %v445 = vmul.f32 %v437, 0.01
        %v446 = vmul.f32 %v438, 0.01
        %v447 = vmul.f32 %v439, 0.01
        %v448 = vmul.f32 %v440, 0.01
        %v449 = vmax.f32 %v433, %v441
        %v450 = vmax.f32 %v434, %v442
        %v451 = vmax.f32 %v435, %v443
        %v452 = vmax.f32 %v436, %v444
        %v453 = vmax.f32 %v437, %v445
        %v454 = vmax.f32 %v438, %v446
        %v455 = vmax.f32 %v439, %v447
        %v456 = vmax.f32 %v440, %v448
        %457 = vst [vmem:[%s277] sm:$0xff] %v449
        %458 = vst [vmem:[%s277 + $0x8] sm:$0xff] %v450
        %459 = vst [vmem:[%s277 + $0x10] sm:$0xff] %v451
        %460 = vst [vmem:[%s277 + $0x18] sm:$0xff] %v452
        %461 = vst [vmem:[%s277 + $0x20] sm:$0xff] %v453
        %462 = vst [vmem:[%s277 + $0x28] sm:$0xff] %v454
        %463 = vst [vmem:[%s277 + $0x30] sm:$0xff] %v455
        %464 = vst [vmem:[%s277 + $0x38] sm:$0xff] %v456
        %s465 = sand.u32 %s129, 1
        %s466 = scalar_lea.sflag [#allocation4], %s465
        %s467 = sand.u32 %s129, 1
        %s468 = smul.addr %s467, 64
        %s469 = scalar_lea.vmem [#allocation8], %s468
        // Predicated region
        $region49: #{tpu_custom_call.1} parent=35 // pred_check
          %p470 = pneg %p139
        $region50: #{tpu_custom_call.1} parent=35 // pred_check_branch
          %472 = sbr.rel (%p470) target = $region52
        $region51: #{tpu_custom_call.1} parent=35 // pred_region
          %474 = vsyncadd %s466, 0
          %s475 = smul.addr %s22, 8
          %s476 = scalar_lea.hbm %s4, %s475
          %s477 = sshll.u32 %s469, 4
          %s478 = int_to_ptr.vmem [resolvable:$true] %s477
          %s479 = sshll.u32 %s476, 4
          %s480 = int_to_ptr.hbm [resolvable:$true] %s479
          %485 = dma.vmem_to_hbm [thread:$0]  %s478, 1024, %s480, %s466, 128, 256, 8
        $region52: #{tpu_custom_call.1} parent=35 // pred_fallthru
          _
      $region36: #{tpu_custom_call.1} parent=5 // pred_fallthru
        _
      %p486 = scmp.le.s32.totalorder 2, %s17
      // Predicated region
      $region53: #{tpu_custom_call.1} parent=5 // pred_check
        %p487 = pneg %p486
      $region54: #{tpu_custom_call.1} parent=5 // pred_check_branch
        %489 = sbr.rel (%p487) target = $region56
      $region55: #{tpu_custom_call.1} parent=5 // pred_region
        %s490 = ssub.s32 %s17, 2
        // Predicated region
        $region57: #{tpu_custom_call.1} parent=55 // pred_check
          %p491 = pneg %p145
        $region58: #{tpu_custom_call.1} parent=55 // pred_check_branch
          %493 = sbr.rel (%p491) target = $region60
        $region59: #{tpu_custom_call.1} parent=55 // pred_region
          %s494 = sand.u32 %s130, 1
          %s495 = scalar_lea.sflag [#allocation4], %s494
          %s496 = sand.u32 %s130, 1
          %s497 = smul.addr %s496, 64
          %s498 = scalar_lea.vmem [#allocation8], %s497
          %500 = dma.done %s495, 1024
        $region60: #{tpu_custom_call.1} parent=55 // pred_fallthru
          _
      $region56: #{tpu_custom_call.1} parent=5 // pred_fallthru
        _
    $region6: #{tpu_custom_call.1} parent=1 // loop_footer
      %s21 = sadd.s32 1, %s17
    $region7: #{tpu_custom_call.1} parent=1 // loop_footer_branch
      %16 = sbr.rel target = $region3
    $region8: #{tpu_custom_call.1} parent=1 // loop_exit
      _
    %501 = vsyncpa [#allocation3], 1
    %s502 = scalar_lea.sflag [#allocation3], 1
    %503 = vsyncpa %s502, 1
    %504 = vsyncpa [#allocation6], 1
    %s505 = scalar_lea.sflag [#allocation6], 1
    %506 = vsyncpa %s505, 1
    %507 = vsyncpa [#allocation4], 1
    %s508 = scalar_lea.sflag [#allocation4], 1
    %509 = vsyncpa %s508, 1

</llo_original>
